<compile_context>
chip_gen: v5e
topology: v5e:2x2
jax: 0.10.0
libtpu: 0.0.40
codegen_flags: <defaults>
</compile_context>

<pallas_src>
import jax
import jax.numpy as jnp
from jax.experimental import pallas as pl
from jax.experimental.pallas import tpu as pltpu

# ---- static model config (small, consistent with the module) ----
IN_FEATURES = 8
PATCH = 2
HIDDEN = 32
CONTEXT = 6
OUT_MULT = 2
NUM_BLOCKS = 2
OUT_FEATURES = IN_FEATURES * OUT_MULT
BATCH = 4
BN_EPS = 1e-5
LRELU_SLOPE = 0.01  # torch.nn.LeakyReLU default negative_slope

# fused / slab layout constants
FUSED_W = HIDDEN * (NUM_BLOCKS + 2)          # 128: [init | top-ctx | blk0-ctx | blk1-ctx]
XC_RAW = IN_FEATURES + CONTEXT               # 14
XC_PAD = 16                                  # [x|ctx] zero-padded to 16 columns
SLAB_LANES = 128

# row offsets inside the single parameter slab (all group bases 8-aligned)
FUSED_W_ROW = 0                              # rows 0..15 : fused [16,128] weight
FUSED_G_ROW = 16                             # row 16     : fused BN gamma [1,128]
FUSED_B_ROW = 17                             # row 17     : fused BN beta  [1,128]
BLK_BN_BASE = 24                             # block i: rows 24+8i .. +3 = g0,b0,g1,b1 (lanes 0..31)
FIN_B_ROW = BLK_BN_BASE + 8 * NUM_BLOCKS     # 40         : final bias (lanes 0..15)
BLK_W_BASE = FIN_B_ROW + 8                   # 48         : block weights, 4 x [32,32] sublane-stacked
FIN_W_BASE = BLK_W_BASE + NUM_BLOCKS * 2 * HIDDEN   # 176  : final weight [32,16]
SLAB_ROWS = FIN_W_BASE + HIDDEN              # 208


# ---------------- parameter / mask construction (glue, plain JAX) -----------
def _create_degrees(n):
    return jnp.arange(1, n + 1, dtype=jnp.int32)


def _mask_and_degrees(in_degrees, in_features, out_features, ar_features,
                      patch_size, is_output):
    out_patchs = out_features // patch_size
    ar_patchs = ar_features // patch_size
    if is_output:
        out_deg = jnp.repeat(_create_degrees(ar_patchs), out_patchs // ar_patchs)
        pmask = (out_deg[:, None] > in_degrees).astype(jnp.float32)
    else:
        _max = max(1, ar_patchs - 1)
        _min = min(1, ar_patchs - 1)
        out_deg = jnp.arange(out_patchs, dtype=jnp.int32) % _max + _min
        pmask = (out_deg[:, None] >= in_degrees).astype(jnp.float32)
    mask = jnp.tile(pmask[:, :, None, None], (1, 1, patch_size, patch_size))
    mask = jnp.transpose(mask, (0, 2, 1, 3)).reshape(out_features, in_features)
    return mask, out_deg


def _xavier(key, out_f, in_f, gain=0.02):
    bound = gain * (6.0 / (in_f + out_f)) ** 0.5
    return jax.random.uniform(key, (out_f, in_f), jnp.float32, -bound, bound)


def _bias(key, out_f, in_f):
    bound = 1.0 / (in_f ** 0.5)
    return jax.random.uniform(key, (1, out_f), jnp.float32, -bound, bound)


def build_params(key):
    keys = jax.random.split(key, 64)
    k = iter(range(64))
    p = {}
    in_deg = _create_degrees(IN_FEATURES // PATCH)

    # init masked layer
    m_init, deg = _mask_and_degrees(in_deg, IN_FEATURES, HIDDEN, IN_FEATURES,
                                    PATCH, is_output=False)
    p["w_init"] = _xavier(keys[next(k)], HIDDEN, IN_FEATURES)
    p["m_init"] = m_init
    p["b_init"] = _bias(keys[next(k)], HIDDEN, IN_FEATURES)
    p["bn_init_g"] = jnp.ones((1, HIDDEN), jnp.float32)
    p["bn_init_b"] = jnp.zeros((1, HIDDEN), jnp.float32)

    # top-level context layer
    p["w_ctx"] = _xavier(keys[next(k)], HIDDEN, CONTEXT)
    p["b_ctx"] = _bias(keys[next(k)], HIDDEN, CONTEXT)
    p["bn_ctx_g"] = jnp.ones((1, HIDDEN), jnp.float32)
    p["bn_ctx_b"] = jnp.zeros((1, HIDDEN), jnp.float32)

    # residual blocks (stacked along a leading block axis)
    prev_deg = deg
    w0, m0, b0, wc, bc, w1, m1, b1 = [], [], [], [], [], [], [], []
    for _ in range(NUM_BLOCKS):
        mk0, d0 = _mask_and_degrees(prev_deg, HIDDEN, HIDDEN, IN_FEATURES,
                                    PATCH, is_output=False)
        mk1, d1 = _mask_and_degrees(d0, HIDDEN, HIDDEN, IN_FEATURES,
                                    PATCH, is_output=False)
        w0.append(_xavier(keys[next(k)], HIDDEN, HIDDEN)); m0.append(mk0)
        b0.append(_bias(keys[next(k)], HIDDEN, HIDDEN))
        wc.append(_xavier(keys[next(k)], HIDDEN, CONTEXT))
        bc.append(_bias(keys[next(k)], HIDDEN, CONTEXT))
        w1.append(_xavier(keys[next(k)], HIDDEN, HIDDEN)); m1.append(mk1)
        b1.append(_bias(keys[next(k)], HIDDEN, HIDDEN))
        prev_deg = d1
    p["blk_w0"] = jnp.stack(w0); p["blk_m0"] = jnp.stack(m0); p["blk_b0"] = jnp.stack(b0)
    p["blk_wc"] = jnp.stack(wc); p["blk_bc"] = jnp.stack(bc)
    p["blk_w1"] = jnp.stack(w1); p["blk_m1"] = jnp.stack(m1); p["blk_b1"] = jnp.stack(b1)
    for nm in ["blk_bn0", "blk_bnc", "blk_bn1"]:
        p[nm + "_g"] = jnp.ones((NUM_BLOCKS, 1, HIDDEN), jnp.float32)
        p[nm + "_b"] = jnp.zeros((NUM_BLOCKS, 1, HIDDEN), jnp.float32)

    # final (is_output=True) masked layer
    m_f, _ = _mask_and_degrees(prev_deg, HIDDEN, OUT_FEATURES, IN_FEATURES,
                               PATCH, is_output=True)
    p["w_final"] = _xavier(keys[next(k)], OUT_FEATURES, HIDDEN)
    p["m_final"] = m_f
    p["b_final"] = _bias(keys[next(k)], OUT_FEATURES, HIDDEN)
    return p


# ---------------- parameter packing into ONE lane-dense slab -----------------
def pack_params(p):
    f32 = jnp.float32
    slab = jnp.zeros((SLAB_ROWS, SLAB_LANES), f32)

    # Block-diagonal fused weight for [x | ctx]:
    #   columns [0:32)   = init layer (masked, transposed)
    #   columns [32:128) = top-ctx | blk0-ctx | blk1-ctx (transposed)
    w_init_t = (p["w_init"] * p["m_init"]).T                                   # [8, 32]
    wc_all = jnp.concatenate(
        [p["w_ctx"].T] + [p["blk_wc"][i].T for i in range(NUM_BLOCKS)], axis=1)  # [6, 96]
    slab = slab.at[0:IN_FEATURES, 0:HIDDEN].set(w_init_t)
    slab = slab.at[IN_FEATURES:XC_RAW, HIDDEN:FUSED_W].set(wc_all)

    # Fused BN gamma/beta over the 128 concatenated columns.
    g_fused = jnp.concatenate(
        [p["bn_init_g"], p["bn_ctx_g"]]
        + [p["blk_bnc_g"][i] for i in range(NUM_BLOCKS)], axis=1)              # [1, 128]
    b_fused = jnp.concatenate(
        [p["bn_init_b"], p["bn_ctx_b"]]
        + [p["blk_bnc_b"][i] for i in range(NUM_BLOCKS)], axis=1)              # [1, 128]
    slab = slab.at[FUSED_G_ROW, :].set(g_fused[0])
    slab = slab.at[FUSED_B_ROW, :].set(b_fused[0])

    # Per-block BN params + masked/transposed block weights (sublane-stacked).
    for i in range(NUM_BLOCKS):
        rb = BLK_BN_BASE + 8 * i
        slab = slab.at[rb + 0, 0:HIDDEN].set(p["blk_bn0_g"][i][0])
        slab = slab.at[rb + 1, 0:HIDDEN].set(p["blk_bn0_b"][i][0])
        slab = slab.at[rb + 2, 0:HIDDEN].set(p["blk_bn1_g"][i][0])
        slab = slab.at[rb + 3, 0:HIDDEN].set(p["blk_bn1_b"][i][0])
        rw = BLK_W_BASE + 2 * i * HIDDEN
        slab = slab.at[rw:rw + HIDDEN, 0:HIDDEN].set(
            (p["blk_w0"][i] * p["blk_m0"][i]).T)                               # [32, 32]
        slab = slab.at[rw + HIDDEN:rw + 2 * HIDDEN, 0:HIDDEN].set(
            (p["blk_w1"][i] * p["blk_m1"][i]).T)                               # [32, 32]

    # Final masked/transposed weight + its (only surviving) bias.
    slab = slab.at[FIN_B_ROW, 0:OUT_FEATURES].set(p["b_final"][0])
    slab = slab.at[FIN_W_BASE:FIN_W_BASE + HIDDEN, 0:OUT_FEATURES].set(
        (p["w_final"] * p["m_final"]).T)                                       # [32, 16]
    return slab


# ---------------- Pallas kernel ----------------------------------------------
def _dot(a, w):  # a: [B, K], w: [K, N] (weights pre-transposed outside kernel)
    return jax.lax.dot_general(a, w, (((1,), (0,)), ((), ())),
                               preferred_element_type=jnp.float32)


def _batchnorm(x, gamma, beta):
    # BatchNorm1d, training mode: biased batch statistics over the batch axis.
    # Single-pass form: sum and sum-of-squares reduced in parallel, then one
    # precomputed per-lane scale/shift applied in a single x*scale + shift pass.
    inv_b = 1.0 / x.shape[0]
    s1 = jnp.sum(x, axis=0, keepdims=True)
    s2 = jnp.sum(x * x, axis=0, keepdims=True)
    mean = s1 * inv_b
    var = jnp.maximum(s2 * inv_b - mean * mean, 0.0)   # clamp: E[x^2]-mean^2 can round < 0
    scale = gamma * jax.lax.rsqrt(var + BN_EPS)
    shift = beta - mean * scale
    return x * scale + shift


def _lrelu(x):
    return jnp.where(x >= 0, x, LRELU_SLOPE * x)


def pmade_kernel(xc_ref, p_ref, o_ref):
    xc = xc_ref[...]                                      # [B, 16] = [x | ctx | 0]

    # Fused init + ALL context-path matmuls in one block-diagonal dot,
    # followed by one per-column BatchNorm over the lane-dense 128-wide result.
    w_fused = p_ref[FUSED_W_ROW:XC_PAD, :]                # [16, 128]
    g_fused = p_ref[FUSED_G_ROW:FUSED_G_ROW + 1, :]       # [1, 128]
    b_fused = p_ref[FUSED_B_ROW:FUSED_B_ROW + 1, :]       # [1, 128]
    y = _batchnorm(_dot(xc, w_fused), g_fused, b_fused)   # [B, 128]
    # (biases of BN-followed layers are dropped: they cancel in x - mean)

    out = _lrelu(y[:, 0:HIDDEN] + y[:, HIDDEN:2 * HIDDEN])

    for i in range(NUM_BLOCKS):                           # static unroll
        identity = out
        rw = BLK_W_BASE + 2 * i * HIDDEN                  # 8-aligned row base
        rb = BLK_BN_BASE + 8 * i                          # 8-aligned row base
        w0 = p_ref[rw:rw + HIDDEN, 0:HIDDEN]              # [32, 32]
        w1 = p_ref[rw + HIDDEN:rw + 2 * HIDDEN, 0:HIDDEN]
        g0 = p_ref[rb + 0:rb + 1, 0:HIDDEN]
        b0 = p_ref[rb + 1:rb + 2, 0:HIDDEN]
        g1 = p_ref[rb + 2:rb + 3, 0:HIDDEN]
        b1 = p_ref[rb + 3:rb + 4, 0:HIDDEN]
        cb = y[:, (2 + i) * HIDDEN:(3 + i) * HIDDEN]      # hoisted context branch

        h = _batchnorm(_dot(out, w0), g0, b0)
        h = _lrelu(h + cb)
        # dropout_rate = 0.0 -> identity
        h = _batchnorm(_dot(h, w1), g1, b1)
        out = _lrelu(h + identity)

    w_f = p_ref[FIN_W_BASE:FIN_W_BASE + HIDDEN, 0:OUT_FEATURES]   # [32, 16]
    b_f = p_ref[FIN_B_ROW:FIN_B_ROW + 1, 0:OUT_FEATURES]          # [1, 16]
    o_ref[...] = _dot(out, w_f) + b_f


@jax.jit
def patch_made_forward(x, context, slab):
    b = x.shape[0]
    pad = jnp.zeros((b, XC_PAD - XC_RAW), jnp.float32)
    xc = jnp.concatenate([x, context, pad], axis=1)       # [B, 16]
    # Tiny model: everything fits in VMEM, single kernel invocation (no grid).
    # NOTE: for repeated invocation (e.g. autoregressive sampling loop) the
    # dominant cost is per-call launch + re-DMAing the ~100 KB slab; amortize
    # with a grid over calls / cross-call prefetch at that call site.
    return pl.pallas_call(
        pmade_kernel,
        out_shape=jax.ShapeDtypeStruct((b, OUT_FEATURES), jnp.float32),
        in_specs=[pl.BlockSpec(memory_space=pltpu.MemorySpace.VMEM)] * 2,
        out_specs=pl.BlockSpec(memory_space=pltpu.MemorySpace.VMEM),
    )(xc, slab)


# ---------------- pure-JAX reference (torch-faithful, for correctness) -------
def ref_forward(x, ctx, p):
    prec = jax.lax.Precision.HIGHEST

    def lin(a, w, b, m=None):
        wm = w if m is None else w * m
        return jnp.dot(a, wm.T, precision=prec) + b

    def bn(a, g, b):
        mu = a.mean(0, keepdims=True)
        var = ((a - mu) ** 2).mean(0, keepdims=True)
        return (a - mu) / jnp.sqrt(var + BN_EPS) * g + b

    def act(a):
        return jnp.where(a >= 0, a, LRELU_SLOPE * a)

    out = lin(x, p["w_init"], p["b_init"], p["m_init"])
    out = bn(out, p["bn_init_g"], p["bn_init_b"])
    c = lin(ctx, p["w_ctx"], p["b_ctx"])
    c = bn(c, p["bn_ctx_g"], p["bn_ctx_b"])
    out = act(out + c)
    for i in range(NUM_BLOCKS):
        identity = out
        h = lin(out, p["blk_w0"][i], p["blk_b0"][i], p["blk_m0"][i])
        h = bn(h, p["blk_bn0_g"][i], p["blk_bn0_b"][i])
        cb = lin(ctx, p["blk_wc"][i], p["blk_bc"][i])
        cb = bn(cb, p["blk_bnc_g"][i], p["blk_bnc_b"][i])
        h = act(h + cb)
        h = lin(h, p["blk_w1"][i], p["blk_b1"][i], p["blk_m1"][i])
        h = bn(h, p["blk_bn1_g"][i], p["blk_bn1_b"][i])
        out = act(h + identity)
    return lin(out, p["w_final"], p["b_final"], p["m_final"])


if __name__ == "__main__":
    key = jax.random.PRNGKey(0)
    k_param, k_x, k_c = jax.random.split(key, 3)
    params = build_params(k_param)
    slab = pack_params(params)
    x = jax.random.normal(k_x, (BATCH, IN_FEATURES), jnp.float32)
    context = jax.random.normal(k_c, (BATCH, CONTEXT), jnp.float32)

    out = patch_made_forward(x, context, slab)
    out = jax.block_until_ready(out)

    ref = ref_forward(x, context, params)
    assert out.shape == (BATCH, OUT_FEATURES)
    assert jnp.allclose(out, ref, rtol=1e-2, atol=1e-3), (
        f"max abs diff {jnp.max(jnp.abs(out - ref))}")
    print("KERNEL_OK")
</pallas_src>

<mosaic_0001>
module attributes {stable_mosaic.version = 11 : i64} {
  func.func @pmade_kernel(%arg0: memref<4x16xf32, #tpu.memory_space<vmem>>, %arg1: memref<208x128xf32, #tpu.memory_space<vmem>>, %arg2: memref<4x16xf32, #tpu.memory_space<vmem>>) attributes {dimension_semantics = [], scalar_prefetch = 0 : i64, scratch_operands = 0 : i64, tpu.core_type = #tpu.core_type<tc>} {
    %c0 = arith.constant 0 : index
    %c0_0 = arith.constant 0 : index
    %0 = vector.load %arg0[%c0, %c0_0] : memref<4x16xf32, #tpu.memory_space<vmem>>, vector<4x16xf32>
    %c0_1 = arith.constant 0 : index
    %c0_2 = arith.constant 0 : index
    %1 = vector.load %arg1[%c0_1, %c0_2] : memref<208x128xf32, #tpu.memory_space<vmem>>, vector<16x128xf32>
    %c16 = arith.constant 16 : index
    %c0_3 = arith.constant 0 : index
    %2 = vector.load %arg1[%c16, %c0_3] : memref<208x128xf32, #tpu.memory_space<vmem>>, vector<1x128xf32>
    %c17 = arith.constant 17 : index
    %c0_4 = arith.constant 0 : index
    %3 = vector.load %arg1[%c17, %c0_4] : memref<208x128xf32, #tpu.memory_space<vmem>>, vector<1x128xf32>
    %cst = arith.constant dense<0.000000e+00> : vector<4x128xf32>
    %4 = tpu.matmul %0, %1, %cst {dimension_numbers = #tpu.dot_dimension_numbers<[1], [0], [0], [1], [0, 0, 1, 1], [], []>} : vector<4x16xf32>, vector<16x128xf32>, vector<4x128xf32> -> vector<4x128xf32>
    %cst_5 = arith.constant dense<0.000000e+00> : vector<128xf32>
    %5 = vector.multi_reduction <add>, %4, %cst_5 [0] : vector<4x128xf32> to vector<128xf32>
    %6 = vector.shape_cast %5 : vector<128xf32> to vector<1x128xf32>
    %7 = arith.mulf %4, %4 : vector<4x128xf32>
    %cst_6 = arith.constant dense<0.000000e+00> : vector<128xf32>
    %8 = vector.multi_reduction <add>, %7, %cst_6 [0] : vector<4x128xf32> to vector<128xf32>
    %9 = vector.shape_cast %8 : vector<128xf32> to vector<1x128xf32>
    %cst_7 = arith.constant 2.500000e-01 : f32
    %10 = vector.broadcast %cst_7 : f32 to vector<1x128xf32>
    %11 = arith.mulf %6, %10 : vector<1x128xf32>
    %cst_8 = arith.constant 2.500000e-01 : f32
    %12 = vector.broadcast %cst_8 : f32 to vector<1x128xf32>
    %13 = arith.mulf %9, %12 : vector<1x128xf32>
    %14 = arith.mulf %11, %11 : vector<1x128xf32>
    %15 = arith.subf %13, %14 : vector<1x128xf32>
    %cst_9 = arith.constant 0.000000e+00 : f32
    %16 = vector.broadcast %cst_9 : f32 to vector<1x128xf32>
    %17 = arith.maximumf %15, %16 : vector<1x128xf32>
    %cst_10 = arith.constant 9.99999974E-6 : f32
    %18 = vector.broadcast %cst_10 : f32 to vector<1x128xf32>
    %19 = arith.addf %17, %18 : vector<1x128xf32>
    %20 = math.rsqrt %19 : vector<1x128xf32>
    %21 = arith.mulf %2, %20 : vector<1x128xf32>
    %22 = arith.mulf %11, %21 : vector<1x128xf32>
    %23 = arith.subf %3, %22 : vector<1x128xf32>
    %24 = vector.broadcast %21 : vector<1x128xf32> to vector<4x128xf32>
    %25 = arith.mulf %4, %24 : vector<4x128xf32>
    %26 = vector.broadcast %23 : vector<1x128xf32> to vector<4x128xf32>
    %27 = arith.addf %25, %26 : vector<4x128xf32>
    %28 = vector.extract_strided_slice %27 {offsets = [0, 0], sizes = [4, 32], strides = [1, 1]} : vector<4x128xf32> to vector<4x32xf32>
    %29 = vector.extract_strided_slice %27 {offsets = [0, 32], sizes = [4, 32], strides = [1, 1]} : vector<4x128xf32> to vector<4x32xf32>
    %30 = arith.addf %28, %29 : vector<4x32xf32>
    %cst_11 = arith.constant 0.000000e+00 : f32
    %31 = vector.broadcast %cst_11 : f32 to vector<4x32xf32>
    %32 = arith.cmpf oge, %30, %31 : vector<4x32xf32>
    %cst_12 = arith.constant 0.00999999977 : f32
    %33 = vector.broadcast %cst_12 : f32 to vector<4x32xf32>
    %34 = arith.mulf %33, %30 : vector<4x32xf32>
    %35 = arith.select %32, %30, %34 : vector<4x32xi1>, vector<4x32xf32>
    %c48 = arith.constant 48 : index
    %c0_13 = arith.constant 0 : index
    %36 = vector.load %arg1[%c48, %c0_13] : memref<208x128xf32, #tpu.memory_space<vmem>>, vector<32x32xf32>
    %c80 = arith.constant 80 : index
    %c0_14 = arith.constant 0 : index
    %37 = vector.load %arg1[%c80, %c0_14] : memref<208x128xf32, #tpu.memory_space<vmem>>, vector<32x32xf32>
    %c24 = arith.constant 24 : index
    %c0_15 = arith.constant 0 : index
    %38 = vector.load %arg1[%c24, %c0_15] : memref<208x128xf32, #tpu.memory_space<vmem>>, vector<1x32xf32>
    %c25 = arith.constant 25 : index
    %c0_16 = arith.constant 0 : index
    %39 = vector.load %arg1[%c25, %c0_16] : memref<208x128xf32, #tpu.memory_space<vmem>>, vector<1x32xf32>
    %c26 = arith.constant 26 : index
    %c0_17 = arith.constant 0 : index
    %40 = vector.load %arg1[%c26, %c0_17] : memref<208x128xf32, #tpu.memory_space<vmem>>, vector<1x32xf32>
    %c27 = arith.constant 27 : index
    %c0_18 = arith.constant 0 : index
    %41 = vector.load %arg1[%c27, %c0_18] : memref<208x128xf32, #tpu.memory_space<vmem>>, vector<1x32xf32>
    %42 = vector.extract_strided_slice %27 {offsets = [0, 64], sizes = [4, 32], strides = [1, 1]} : vector<4x128xf32> to vector<4x32xf32>
    %cst_19 = arith.constant dense<0.000000e+00> : vector<4x32xf32>
    %43 = tpu.matmul %35, %36, %cst_19 {dimension_numbers = #tpu.dot_dimension_numbers<[1], [0], [0], [1], [0, 0, 1, 1], [], []>} : vector<4x32xf32>, vector<32x32xf32>, vector<4x32xf32> -> vector<4x32xf32>
    %cst_20 = arith.constant dense<0.000000e+00> : vector<32xf32>
    %44 = vector.multi_reduction <add>, %43, %cst_20 [0] : vector<4x32xf32> to vector<32xf32>
    %45 = vector.shape_cast %44 : vector<32xf32> to vector<1x32xf32>
    %46 = arith.mulf %43, %43 : vector<4x32xf32>
    %cst_21 = arith.constant dense<0.000000e+00> : vector<32xf32>
    %47 = vector.multi_reduction <add>, %46, %cst_21 [0] : vector<4x32xf32> to vector<32xf32>
    %48 = vector.shape_cast %47 : vector<32xf32> to vector<1x32xf32>
    %cst_22 = arith.constant 2.500000e-01 : f32
    %49 = vector.broadcast %cst_22 : f32 to vector<1x32xf32>
    %50 = arith.mulf %45, %49 : vector<1x32xf32>
    %cst_23 = arith.constant 2.500000e-01 : f32
    %51 = vector.broadcast %cst_23 : f32 to vector<1x32xf32>
    %52 = arith.mulf %48, %51 : vector<1x32xf32>
    %53 = arith.mulf %50, %50 : vector<1x32xf32>
    %54 = arith.subf %52, %53 : vector<1x32xf32>
    %cst_24 = arith.constant 0.000000e+00 : f32
    %55 = vector.broadcast %cst_24 : f32 to vector<1x32xf32>
    %56 = arith.maximumf %54, %55 : vector<1x32xf32>
    %cst_25 = arith.constant 9.99999974E-6 : f32
    %57 = vector.broadcast %cst_25 : f32 to vector<1x32xf32>
    %58 = arith.addf %56, %57 : vector<1x32xf32>
    %59 = math.rsqrt %58 : vector<1x32xf32>
    %60 = arith.mulf %38, %59 : vector<1x32xf32>
    %61 = arith.mulf %50, %60 : vector<1x32xf32>
    %62 = arith.subf %39, %61 : vector<1x32xf32>
    %63 = vector.broadcast %60 : vector<1x32xf32> to vector<4x32xf32>
    %64 = arith.mulf %43, %63 : vector<4x32xf32>
    %65 = vector.broadcast %62 : vector<1x32xf32> to vector<4x32xf32>
    %66 = arith.addf %64, %65 : vector<4x32xf32>
    %67 = arith.addf %66, %42 : vector<4x32xf32>
    %cst_26 = arith.constant 0.000000e+00 : f32
    %68 = vector.broadcast %cst_26 : f32 to vector<4x32xf32>
    %69 = arith.cmpf oge, %67, %68 : vector<4x32xf32>
    %cst_27 = arith.constant 0.00999999977 : f32
    %70 = vector.broadcast %cst_27 : f32 to vector<4x32xf32>
    %71 = arith.mulf %70, %67 : vector<4x32xf32>
    %72 = arith.select %69, %67, %71 : vector<4x32xi1>, vector<4x32xf32>
    %cst_28 = arith.constant dense<0.000000e+00> : vector<4x32xf32>
    %73 = tpu.matmul %72, %37, %cst_28 {dimension_numbers = #tpu.dot_dimension_numbers<[1], [0], [0], [1], [0, 0, 1, 1], [], []>} : vector<4x32xf32>, vector<32x32xf32>, vector<4x32xf32> -> vector<4x32xf32>
    %cst_29 = arith.constant dense<0.000000e+00> : vector<32xf32>
    %74 = vector.multi_reduction <add>, %73, %cst_29 [0] : vector<4x32xf32> to vector<32xf32>
    %75 = vector.shape_cast %74 : vector<32xf32> to vector<1x32xf32>
    %76 = arith.mulf %73, %73 : vector<4x32xf32>
    %cst_30 = arith.constant dense<0.000000e+00> : vector<32xf32>
    %77 = vector.multi_reduction <add>, %76, %cst_30 [0] : vector<4x32xf32> to vector<32xf32>
    %78 = vector.shape_cast %77 : vector<32xf32> to vector<1x32xf32>
    %cst_31 = arith.constant 2.500000e-01 : f32
    %79 = vector.broadcast %cst_31 : f32 to vector<1x32xf32>
    %80 = arith.mulf %75, %79 : vector<1x32xf32>
    %cst_32 = arith.constant 2.500000e-01 : f32
    %81 = vector.broadcast %cst_32 : f32 to vector<1x32xf32>
    %82 = arith.mulf %78, %81 : vector<1x32xf32>
    %83 = arith.mulf %80, %80 : vector<1x32xf32>
    %84 = arith.subf %82, %83 : vector<1x32xf32>
    %cst_33 = arith.constant 0.000000e+00 : f32
    %85 = vector.broadcast %cst_33 : f32 to vector<1x32xf32>
    %86 = arith.maximumf %84, %85 : vector<1x32xf32>
    %cst_34 = arith.constant 9.99999974E-6 : f32
    %87 = vector.broadcast %cst_34 : f32 to vector<1x32xf32>
    %88 = arith.addf %86, %87 : vector<1x32xf32>
    %89 = math.rsqrt %88 : vector<1x32xf32>
    %90 = arith.mulf %40, %89 : vector<1x32xf32>
    %91 = arith.mulf %80, %90 : vector<1x32xf32>
    %92 = arith.subf %41, %91 : vector<1x32xf32>
    %93 = vector.broadcast %90 : vector<1x32xf32> to vector<4x32xf32>
    %94 = arith.mulf %73, %93 : vector<4x32xf32>
    %95 = vector.broadcast %92 : vector<1x32xf32> to vector<4x32xf32>
    %96 = arith.addf %94, %95 : vector<4x32xf32>
    %97 = arith.addf %96, %35 : vector<4x32xf32>
    %cst_35 = arith.constant 0.000000e+00 : f32
    %98 = vector.broadcast %cst_35 : f32 to vector<4x32xf32>
    %99 = arith.cmpf oge, %97, %98 : vector<4x32xf32>
    %cst_36 = arith.constant 0.00999999977 : f32
    %100 = vector.broadcast %cst_36 : f32 to vector<4x32xf32>
    %101 = arith.mulf %100, %97 : vector<4x32xf32>
    %102 = arith.select %99, %97, %101 : vector<4x32xi1>, vector<4x32xf32>
    %c112 = arith.constant 112 : index
    %c0_37 = arith.constant 0 : index
    %103 = vector.load %arg1[%c112, %c0_37] : memref<208x128xf32, #tpu.memory_space<vmem>>, vector<32x32xf32>
    %c144 = arith.constant 144 : index
    %c0_38 = arith.constant 0 : index
    %104 = vector.load %arg1[%c144, %c0_38] : memref<208x128xf32, #tpu.memory_space<vmem>>, vector<32x32xf32>
    %c32 = arith.constant 32 : index
    %c0_39 = arith.constant 0 : index
    %105 = vector.load %arg1[%c32, %c0_39] : memref<208x128xf32, #tpu.memory_space<vmem>>, vector<1x32xf32>
    %c33 = arith.constant 33 : index
    %c0_40 = arith.constant 0 : index
    %106 = vector.load %arg1[%c33, %c0_40] : memref<208x128xf32, #tpu.memory_space<vmem>>, vector<1x32xf32>
    %c34 = arith.constant 34 : index
    %c0_41 = arith.constant 0 : index
    %107 = vector.load %arg1[%c34, %c0_41] : memref<208x128xf32, #tpu.memory_space<vmem>>, vector<1x32xf32>
    %c35 = arith.constant 35 : index
    %c0_42 = arith.constant 0 : index
    %108 = vector.load %arg1[%c35, %c0_42] : memref<208x128xf32, #tpu.memory_space<vmem>>, vector<1x32xf32>
    %109 = vector.extract_strided_slice %27 {offsets = [0, 96], sizes = [4, 32], strides = [1, 1]} : vector<4x128xf32> to vector<4x32xf32>
    %cst_43 = arith.constant dense<0.000000e+00> : vector<4x32xf32>
    %110 = tpu.matmul %102, %103, %cst_43 {dimension_numbers = #tpu.dot_dimension_numbers<[1], [0], [0], [1], [0, 0, 1, 1], [], []>} : vector<4x32xf32>, vector<32x32xf32>, vector<4x32xf32> -> vector<4x32xf32>
    %cst_44 = arith.constant dense<0.000000e+00> : vector<32xf32>
    %111 = vector.multi_reduction <add>, %110, %cst_44 [0] : vector<4x32xf32> to vector<32xf32>
    %112 = vector.shape_cast %111 : vector<32xf32> to vector<1x32xf32>
    %113 = arith.mulf %110, %110 : vector<4x32xf32>
    %cst_45 = arith.constant dense<0.000000e+00> : vector<32xf32>
    %114 = vector.multi_reduction <add>, %113, %cst_45 [0] : vector<4x32xf32> to vector<32xf32>
    %115 = vector.shape_cast %114 : vector<32xf32> to vector<1x32xf32>
    %cst_46 = arith.constant 2.500000e-01 : f32
    %116 = vector.broadcast %cst_46 : f32 to vector<1x32xf32>
    %117 = arith.mulf %112, %116 : vector<1x32xf32>
    %cst_47 = arith.constant 2.500000e-01 : f32
    %118 = vector.broadcast %cst_47 : f32 to vector<1x32xf32>
    %119 = arith.mulf %115, %118 : vector<1x32xf32>
    %120 = arith.mulf %117, %117 : vector<1x32xf32>
    %121 = arith.subf %119, %120 : vector<1x32xf32>
    %cst_48 = arith.constant 0.000000e+00 : f32
    %122 = vector.broadcast %cst_48 : f32 to vector<1x32xf32>
    %123 = arith.maximumf %121, %122 : vector<1x32xf32>
    %cst_49 = arith.constant 9.99999974E-6 : f32
    %124 = vector.broadcast %cst_49 : f32 to vector<1x32xf32>
    %125 = arith.addf %123, %124 : vector<1x32xf32>
    %126 = math.rsqrt %125 : vector<1x32xf32>
    %127 = arith.mulf %105, %126 : vector<1x32xf32>
    %128 = arith.mulf %117, %127 : vector<1x32xf32>
    %129 = arith.subf %106, %128 : vector<1x32xf32>
    %130 = vector.broadcast %127 : vector<1x32xf32> to vector<4x32xf32>
    %131 = arith.mulf %110, %130 : vector<4x32xf32>
    %132 = vector.broadcast %129 : vector<1x32xf32> to vector<4x32xf32>
    %133 = arith.addf %131, %132 : vector<4x32xf32>
    %134 = arith.addf %133, %109 : vector<4x32xf32>
    %cst_50 = arith.constant 0.000000e+00 : f32
    %135 = vector.broadcast %cst_50 : f32 to vector<4x32xf32>
    %136 = arith.cmpf oge, %134, %135 : vector<4x32xf32>
    %cst_51 = arith.constant 0.00999999977 : f32
    %137 = vector.broadcast %cst_51 : f32 to vector<4x32xf32>
    %138 = arith.mulf %137, %134 : vector<4x32xf32>
    %139 = arith.select %136, %134, %138 : vector<4x32xi1>, vector<4x32xf32>
    %cst_52 = arith.constant dense<0.000000e+00> : vector<4x32xf32>
    %140 = tpu.matmul %139, %104, %cst_52 {dimension_numbers = #tpu.dot_dimension_numbers<[1], [0], [0], [1], [0, 0, 1, 1], [], []>} : vector<4x32xf32>, vector<32x32xf32>, vector<4x32xf32> -> vector<4x32xf32>
    %cst_53 = arith.constant dense<0.000000e+00> : vector<32xf32>
    %141 = vector.multi_reduction <add>, %140, %cst_53 [0] : vector<4x32xf32> to vector<32xf32>
    %142 = vector.shape_cast %141 : vector<32xf32> to vector<1x32xf32>
    %143 = arith.mulf %140, %140 : vector<4x32xf32>
    %cst_54 = arith.constant dense<0.000000e+00> : vector<32xf32>
    %144 = vector.multi_reduction <add>, %143, %cst_54 [0] : vector<4x32xf32> to vector<32xf32>
    %145 = vector.shape_cast %144 : vector<32xf32> to vector<1x32xf32>
    %cst_55 = arith.constant 2.500000e-01 : f32
    %146 = vector.broadcast %cst_55 : f32 to vector<1x32xf32>
    %147 = arith.mulf %142, %146 : vector<1x32xf32>
    %cst_56 = arith.constant 2.500000e-01 : f32
    %148 = vector.broadcast %cst_56 : f32 to vector<1x32xf32>
    %149 = arith.mulf %145, %148 : vector<1x32xf32>
    %150 = arith.mulf %147, %147 : vector<1x32xf32>
    %151 = arith.subf %149, %150 : vector<1x32xf32>
    %cst_57 = arith.constant 0.000000e+00 : f32
    %152 = vector.broadcast %cst_57 : f32 to vector<1x32xf32>
    %153 = arith.maximumf %151, %152 : vector<1x32xf32>
    %cst_58 = arith.constant 9.99999974E-6 : f32
    %154 = vector.broadcast %cst_58 : f32 to vector<1x32xf32>
    %155 = arith.addf %153, %154 : vector<1x32xf32>
    %156 = math.rsqrt %155 : vector<1x32xf32>
    %157 = arith.mulf %107, %156 : vector<1x32xf32>
    %158 = arith.mulf %147, %157 : vector<1x32xf32>
    %159 = arith.subf %108, %158 : vector<1x32xf32>
    %160 = vector.broadcast %157 : vector<1x32xf32> to vector<4x32xf32>
    %161 = arith.mulf %140, %160 : vector<4x32xf32>
    %162 = vector.broadcast %159 : vector<1x32xf32> to vector<4x32xf32>
    %163 = arith.addf %161, %162 : vector<4x32xf32>
    %164 = arith.addf %163, %102 : vector<4x32xf32>
    %cst_59 = arith.constant 0.000000e+00 : f32
    %165 = vector.broadcast %cst_59 : f32 to vector<4x32xf32>
    %166 = arith.cmpf oge, %164, %165 : vector<4x32xf32>
    %cst_60 = arith.constant 0.00999999977 : f32
    %167 = vector.broadcast %cst_60 : f32 to vector<4x32xf32>
    %168 = arith.mulf %167, %164 : vector<4x32xf32>
    %169 = arith.select %166, %164, %168 : vector<4x32xi1>, vector<4x32xf32>
    %c176 = arith.constant 176 : index
    %c0_61 = arith.constant 0 : index
    %170 = vector.load %arg1[%c176, %c0_61] : memref<208x128xf32, #tpu.memory_space<vmem>>, vector<32x16xf32>
    %c40 = arith.constant 40 : index
    %c0_62 = arith.constant 0 : index
    %171 = vector.load %arg1[%c40, %c0_62] : memref<208x128xf32, #tpu.memory_space<vmem>>, vector<1x16xf32>
    %cst_63 = arith.constant dense<0.000000e+00> : vector<4x16xf32>
    %172 = tpu.matmul %169, %170, %cst_63 {dimension_numbers = #tpu.dot_dimension_numbers<[1], [0], [0], [1], [0, 0, 1, 1], [], []>} : vector<4x32xf32>, vector<32x16xf32>, vector<4x16xf32> -> vector<4x16xf32>
    %173 = vector.broadcast %171 : vector<1x16xf32> to vector<4x16xf32>
    %174 = arith.addf %172, %173 : vector<4x16xf32>
    %c0_64 = arith.constant 0 : index
    %c0_65 = arith.constant 0 : index
    %175 = vector.load %arg2[%c0_64, %c0_65] : memref<4x16xf32, #tpu.memory_space<vmem>>, vector<4x16xf32>
    tpu.vector_store %arg2[%c0_64, %c0_65], %174 {strides = array<i32>} : memref<4x16xf32, #tpu.memory_space<vmem>>, vector<4x16xf32>,
    return
  }
}

</mosaic_0001>

<llo_original>
// kernel: patch_made_forward.1
$region0: #{patch_made_forward.1}
  #allocation0 [shape = 'u32[]', space=smem, size = 0x4, offset = 0x4, fixed_abs, tag = 'smem constant byte address 0x4 - core index']
  #allocation1 [shape = 'u32[72,128]{1,0:T(1,128)}', space=vmem, size = 0x9000, scoped, tag = 'internal scratch']
  %s0 = inlined_call_operand.vmem [shape: f32[4,16], index: 0, kind: input, shape index: {}]
  %s1 = inlined_call_operand.hbm [shape: f32[208,128], index: 1, kind: input, shape index: {}]
  %s2 = inlined_call_operand.hbm [shape: f32[4,16], index: 2, kind: output, shape index: {}]
  %s3 = sld [smem:[#allocation0]]
  $region22: #{patch_made_forward.1} parent=0
    _
  %s5 = ssub.s32 1, %s3
  %s6 = scalar_select 0, %s5, %s3
  $region1: #{patch_made_forward.1} parent=0
    #allocation2 [shape = 'u8[106496]{0}', space=vmem, size = 0x1a000, scoped, tag = 'input window, operand 1, single buffered']
    #allocation3 [shape = 's32[1]{0}', space=sflag, size = 0x4, scoped, tag = 'scoped memory for patch_made_forward.1']
    #allocation4 [shape = 's32[1]{0}', space=sflag, size = 0x4, scoped, tag = 'scoped memory for patch_made_forward.1']
    #allocation5 [shape = 'u8[2048]{0}', space=vmem, size = 0x800, scoped, tag = 'output window, operand 0, single buffered']
    %7 = vsyncpa [#allocation3], 0
    %8 = vsyncpa [#allocation4], 0
    // Predicated region
    $region2: #{patch_made_forward.1} parent=1 // pred_check
      _
    $region3: #{patch_made_forward.1} parent=1 // pred_check_branch
      %10 = sbr.rel (0) target = $region5
    $region4: #{patch_made_forward.1} parent=1 // pred_region
      _
    $region5: #{patch_made_forward.1} parent=1 // pred_fallthru
      _
    // Predicated region
    $region6: #{patch_made_forward.1} parent=1 // pred_check
      _
    $region7: #{patch_made_forward.1} parent=1 // pred_check_branch
      %12 = sbr.rel (0) target = $region9
    $region8: #{patch_made_forward.1} parent=1 // pred_region
      %14 = vsyncadd [#allocation3], 0
      %s15 = sshll.u32 %s1, 4
      %s16 = int_to_ptr.hbm [resolvable:$true] %s15
      %s17 = sshll.u32 [#allocation2], 4
      %s18 = int_to_ptr.vmem [resolvable:$true] %s17
      %23 = dma.hbm_to_vmem [thread:$0]  %s16, 3328, %s18, [#allocation3], 128, 128, 8
    $region9: #{patch_made_forward.1} parent=1 // pred_fallthru
      _
    // Predicated region
    $region10: #{patch_made_forward.1} parent=1 // pred_check
      _
    $region11: #{patch_made_forward.1} parent=1 // pred_check_branch
      %25 = sbr.rel (0) target = $region13
    $region12: #{patch_made_forward.1} parent=1 // pred_region
      %27 = dma.done [#allocation3], 3328
    $region13: #{patch_made_forward.1} parent=1 // pred_fallthru
      _
    %v28 = vld [vmem:[%s0] sm:$0xf]
    %v29 = vld [vmem:[#allocation2] sm:$0xff]
    %v30 = vld [vmem:[#allocation2 + $0x8] sm:$0xff]
    %v31 = vld [vmem:[#allocation2 + $0x10] sm:$0x1]
    %v32 = vld [vmem:[#allocation2 + $0x11] sm:$0x1]
    %vm33 = vcmask 130048
    %v35 = vsel %vm33, %v28, 0
    %37 = vmatpush.msra.mxu0 0.0
    %38 = vmatpush.msra.mxu0 0.0
    %39 = vmatpush.msra.mxu0 0.0
    %40 = vmatpush.msra.mxu0 0.0
    %41 = vmatpush.msra.mxu0 0.0
    %42 = vmatpush.msra.mxu0 0.0
    %43 = vmatpush.msra.mxu0 0.0
    %44 = vmatpush.msra.mxu0 0.0
    %45 = vmatpush.msra.mxu0 0.0
    %46 = vmatpush.msra.mxu0 0.0
    %47 = vmatpush.msra.mxu0 0.0
    %48 = vmatpush.msra.mxu0 0.0
    %49 = vmatpush.msra.mxu0 0.0
    %50 = vmatpush.msra.mxu0 0.0
    %51 = vmatpush.msra.mxu0 %v30
    %52 = vmatpush.msra.mxu0 %v29
    %53 = vmatmul.f32.gmra.mxu0 %v35
    %v54 = vpop.f32.mrf.mxu0
    %v55 = vadd.f32 0.0, %v54
    %56 = vdwg.mxu0
    %vm57 = vcmask 1043456
    %v58 = vsel %vm57, %v55, 0.0
    %v59 = vrot.slane %v58, 4
    %v60 = vadd.f32 %v58, %v59
    %v61 = vrot.slane %v60, 2
    %v62 = vadd.f32 %v60, %v61
    %v63 = vrot.slane %v62, 1
    %v64 = vadd.f32 %v62, %v63
    %v65 = vmul.f32 %v55, %v55
    %v66 = vsel %vm57, %v65, 0.0
    %v67 = vrot.slane %v66, 4
    %v68 = vadd.f32 %v66, %v67
    %v69 = vrot.slane %v68, 2
    %v70 = vadd.f32 %v68, %v69
    %v71 = vrot.slane %v70, 1
    %v72 = vadd.f32 %v70, %v71
    %v73 = vmul.f32 %v64, 0.25
    %v74 = vmul.f32 %v72, 0.25
    %v75 = vmul.f32 %v73, %v73
    %v76 = vsub.f32 %v74, %v75
    %v77 = vmax.f32 %v76, 0.0
    %v78 = vadd.f32 %v77, 1e-05
    %v79 = vrsqrt.pop %v78
    %v80 = vmul.f32 %v79, %v78
    %v81 = vmul.f32 %v80, %v79
    %v82 = vmul.f32 0.5, %v81
    %v83 = vsub.f32 1.5, %v82
    %v84 = vmul.f32 %v79, %v83
    %vm85 = vweird.f32 %v78
    %vm86 = vweird.f32 %v79
    %vm87 = vmor %vm85, %vm86
    %v88 = vsel %vm87, %v79, %v84
    %v89 = vmul.f32 %v31, %v88
    %v90 = vmul.f32 %v73, %v89
    %v91 = vsub.f32 %v32, %v90
    %v92 = vperm.slane %v89, 0
    %v93 = vmul.f32 %v55, %v92
    %v94 = vperm.slane %v91, 0
    %v95 = vadd.f32 %v93, %v94
    %97 = vrot.lane.b32.xlu0 %v95, 96
    %v98 = vpop.permute.xlu0 %97
    %v100 = vadd.f32 %v95, %v98
    %vm101 = vcmp.ge.f32.partialorder %v100, 0.0
    %v102 = vmul.f32 %v100, 0.01
    %v103 = vsel %vm101, %v100, %v102
    %v104 = vld [vmem:[#allocation2 + $0x30] sm:$0xff]
    %v105 = vld [vmem:[#allocation2 + $0x38] sm:$0xff]
    %v106 = vld [vmem:[#allocation2 + $0x40] sm:$0xff]
    %v107 = vld [vmem:[#allocation2 + $0x48] sm:$0xff]
    %v108 = vld [vmem:[#allocation2 + $0x50] sm:$0xff]
    %v109 = vld [vmem:[#allocation2 + $0x58] sm:$0xff]
    %v110 = vld [vmem:[#allocation2 + $0x60] sm:$0xff]
    %v111 = vld [vmem:[#allocation2 + $0x68] sm:$0xff]
    %v112 = vld [vmem:[#allocation2 + $0x18] sm:$0x1]
    %v113 = vld [vmem:[#allocation2 + $0x19] sm:$0x1]
    %v114 = vld [vmem:[#allocation2 + $0x1a] sm:$0x1]
    %v115 = vld [vmem:[#allocation2 + $0x1b] sm:$0x1]
    %vm116 = vcmask 261120
    %v118 = vsel %vm116, %v103, 0
    %120 = vmatpush.msra.mxu0 0.0
    %121 = vmatpush.msra.mxu0 0.0
    %122 = vmatpush.msra.mxu0 0.0
    %123 = vmatpush.msra.mxu0 0.0
    %124 = vmatpush.msra.mxu0 0.0
    %125 = vmatpush.msra.mxu0 0.0
    %126 = vmatpush.msra.mxu0 0.0
    %127 = vmatpush.msra.mxu0 0.0
    %128 = vmatpush.msra.mxu0 0.0
    %129 = vmatpush.msra.mxu0 0.0
    %130 = vmatpush.msra.mxu0 0.0
    %131 = vmatpush.msra.mxu0 0.0
    %132 = vmatpush.msra.mxu0 %v107
    %133 = vmatpush.msra.mxu0 %v106
    %134 = vmatpush.msra.mxu0 %v105
    %135 = vmatpush.msra.mxu0 %v104
    %136 = vmatmul.f32.gmra.mxu0 %v118
    %v137 = vpop.f32.mrf.mxu0
    %v138 = vadd.f32 0.0, %v137
    %139 = vdwg.mxu0
    %vm140 = vcmask 257024
    %v141 = vsel %vm140, %v138, 0.0
    %v142 = vrot.slane %v141, 4
    %v143 = vadd.f32 %v141, %v142
    %v144 = vrot.slane %v143, 2
    %v145 = vadd.f32 %v143, %v144
    %v146 = vrot.slane %v145, 1
    %v147 = vadd.f32 %v145, %v146
    %v148 = vmul.f32 %v138, %v138
    %v149 = vsel %vm140, %v148, 0.0
    %v150 = vrot.slane %v149, 4
    %v151 = vadd.f32 %v149, %v150
    %v152 = vrot.slane %v151, 2
    %v153 = vadd.f32 %v151, %v152
    %v154 = vrot.slane %v153, 1
    %v155 = vadd.f32 %v153, %v154
    %v156 = vmul.f32 %v147, 0.25
    %v157 = vmul.f32 %v155, 0.25
    %v158 = vmul.f32 %v156, %v156
    %v159 = vsub.f32 %v157, %v158
    %v160 = vmax.f32 %v159, 0.0
    %v161 = vadd.f32 %v160, 1e-05
    %v162 = vrsqrt.pop %v161
    %v163 = vmul.f32 %v162, %v161
    %v164 = vmul.f32 %v163, %v162
    %v165 = vmul.f32 0.5, %v164
    %v166 = vsub.f32 1.5, %v165
    %v167 = vmul.f32 %v162, %v166
    %vm168 = vweird.f32 %v161
    %vm169 = vweird.f32 %v162
    %vm170 = vmor %vm168, %vm169
    %v171 = vsel %vm170, %v162, %v167
    %v172 = vmul.f32 %v112, %v171
    %v173 = vmul.f32 %v156, %v172
    %v174 = vsub.f32 %v113, %v173
    %v175 = vperm.slane %v172, 0
    %v176 = vmul.f32 %v138, %v175
    %v177 = vperm.slane %v174, 0
    %v178 = vadd.f32 %v176, %v177
    %179 = vrot.lane.b32.xlu0 %v95, 64
    %v180 = vpop.permute.xlu0 %179
    %v182 = vadd.f32 %v178, %v180
    %vm183 = vcmp.ge.f32.partialorder %v182, 0.0
    %v184 = vmul.f32 %v182, 0.01
    %v185 = vsel %vm183, %v182, %v184
    %v187 = vsel %vm116, %v185, 0
    %189 = vmatpush.msra.mxu0 0.0
    %190 = vmatpush.msra.mxu0 0.0
    %191 = vmatpush.msra.mxu0 0.0
    %192 = vmatpush.msra.mxu0 0.0
    %193 = vmatpush.msra.mxu0 0.0
    %194 = vmatpush.msra.mxu0 0.0
    %195 = vmatpush.msra.mxu0 0.0
    %196 = vmatpush.msra.mxu0 0.0
    %197 = vmatpush.msra.mxu0 0.0
    %198 = vmatpush.msra.mxu0 0.0
    %199 = vmatpush.msra.mxu0 0.0
    %200 = vmatpush.msra.mxu0 0.0
    %201 = vmatpush.msra.mxu0 %v111
    %202 = vmatpush.msra.mxu0 %v110
    %203 = vmatpush.msra.mxu0 %v109
    %204 = vmatpush.msra.mxu0 %v108
    %205 = vmatmul.f32.gmra.mxu0 %v187
    %v206 = vpop.f32.mrf.mxu0
    %v207 = vadd.f32 0.0, %v206
    %208 = vdwg.mxu0
    %v209 = vsel %vm140, %v207, 0.0
    %v210 = vrot.slane %v209, 4
    %v211 = vadd.f32 %v209, %v210
    %v212 = vrot.slane %v211, 2
    %v213 = vadd.f32 %v211, %v212
    %v214 = vrot.slane %v213, 1
    %v215 = vadd.f32 %v213, %v214
    %v216 = vmul.f32 %v207, %v207
    %v217 = vsel %vm140, %v216, 0.0
    %v218 = vrot.slane %v217, 4
    %v219 = vadd.f32 %v217, %v218
    %v220 = vrot.slane %v219, 2
    %v221 = vadd.f32 %v219, %v220
    %v222 = vrot.slane %v221, 1
    %v223 = vadd.f32 %v221, %v222
    %v224 = vmul.f32 %v215, 0.25
    %v225 = vmul.f32 %v223, 0.25
    %v226 = vmul.f32 %v224, %v224
    %v227 = vsub.f32 %v225, %v226
    %v228 = vmax.f32 %v227, 0.0
    %v229 = vadd.f32 %v228, 1e-05
    %v230 = vrsqrt.pop %v229
    %v231 = vmul.f32 %v230, %v229
    %v232 = vmul.f32 %v231, %v230
    %v233 = vmul.f32 0.5, %v232
    %v234 = vsub.f32 1.5, %v233
    %v235 = vmul.f32 %v230, %v234
    %vm236 = vweird.f32 %v229
    %vm237 = vweird.f32 %v230
    %vm238 = vmor %vm236, %vm237
    %v239 = vsel %vm238, %v230, %v235
    %v240 = vmul.f32 %v114, %v239
    %v241 = vmul.f32 %v224, %v240
    %v242 = vsub.f32 %v115, %v241
    %v243 = vperm.slane %v240, 0
    %v244 = vmul.f32 %v207, %v243
    %v245 = vperm.slane %v242, 0
    %v246 = vadd.f32 %v244, %v245
    %v247 = vadd.f32 %v246, %v103
    %vm248 = vcmp.ge.f32.partialorder %v247, 0.0
    %v249 = vmul.f32 %v247, 0.01
    %v250 = vsel %vm248, %v247, %v249
    %v251 = vld [vmem:[#allocation2 + $0x70] sm:$0xff]
    %v252 = vld [vmem:[#allocation2 + $0x78] sm:$0xff]
    %v253 = vld [vmem:[#allocation2 + $0x80] sm:$0xff]
    %v254 = vld [vmem:[#allocation2 + $0x88] sm:$0xff]
    %v255 = vld [vmem:[#allocation2 + $0x90] sm:$0xff]
    %v256 = vld [vmem:[#allocation2 + $0x98] sm:$0xff]
    %v257 = vld [vmem:[#allocation2 + $0xa0] sm:$0xff]
    %v258 = vld [vmem:[#allocation2 + $0xa8] sm:$0xff]
    %v259 = vld [vmem:[#allocation2 + $0x20] sm:$0x1]
    %v260 = vld [vmem:[#allocation2 + $0x21] sm:$0x1]
    %v261 = vld [vmem:[#allocation2 + $0x22] sm:$0x1]
    %v262 = vld [vmem:[#allocation2 + $0x23] sm:$0x1]
    %v264 = vsel %vm116, %v250, 0
    %266 = vmatpush.msra.mxu0 0.0
    %267 = vmatpush.msra.mxu0 0.0
    %268 = vmatpush.msra.mxu0 0.0
    %269 = vmatpush.msra.mxu0 0.0
    %270 = vmatpush.msra.mxu0 0.0
    %271 = vmatpush.msra.mxu0 0.0
    %272 = vmatpush.msra.mxu0 0.0
    %273 = vmatpush.msra.mxu0 0.0
    %274 = vmatpush.msra.mxu0 0.0
    %275 = vmatpush.msra.mxu0 0.0
    %276 = vmatpush.msra.mxu0 0.0
    %277 = vmatpush.msra.mxu0 0.0
    %278 = vmatpush.msra.mxu0 %v254
    %279 = vmatpush.msra.mxu0 %v253
    %280 = vmatpush.msra.mxu0 %v252
    %281 = vmatpush.msra.mxu0 %v251
    %282 = vmatmul.f32.gmra.mxu0 %v264
    %v283 = vpop.f32.mrf.mxu0
    %v284 = vadd.f32 0.0, %v283
    %285 = vdwg.mxu0
    %v286 = vsel %vm140, %v284, 0.0
    %v287 = vrot.slane %v286, 4
    %v288 = vadd.f32 %v286, %v287
    %v289 = vrot.slane %v288, 2
    %v290 = vadd.f32 %v288, %v289
    %v291 = vrot.slane %v290, 1
    %v292 = vadd.f32 %v290, %v291
    %v293 = vmul.f32 %v284, %v284
    %v294 = vsel %vm140, %v293, 0.0
    %v295 = vrot.slane %v294, 4
    %v296 = vadd.f32 %v294, %v295
    %v297 = vrot.slane %v296, 2
    %v298 = vadd.f32 %v296, %v297
    %v299 = vrot.slane %v298, 1
    %v300 = vadd.f32 %v298, %v299
    %v301 = vmul.f32 %v292, 0.25
    %v302 = vmul.f32 %v300, 0.25
    %v303 = vmul.f32 %v301, %v301
    %v304 = vsub.f32 %v302, %v303
    %v305 = vmax.f32 %v304, 0.0
    %v306 = vadd.f32 %v305, 1e-05
    %v307 = vrsqrt.pop %v306
    %v308 = vmul.f32 %v307, %v306
    %v309 = vmul.f32 %v308, %v307
    %v310 = vmul.f32 0.5, %v309
    %v311 = vsub.f32 1.5, %v310
    %v312 = vmul.f32 %v307, %v311
    %vm313 = vweird.f32 %v306
    %vm314 = vweird.f32 %v307
    %vm315 = vmor %vm313, %vm314
    %v316 = vsel %vm315, %v307, %v312
    %v317 = vmul.f32 %v259, %v316
    %v318 = vmul.f32 %v301, %v317
    %v319 = vsub.f32 %v260, %v318
    %v320 = vperm.slane %v317, 0
    %v321 = vmul.f32 %v284, %v320
    %v322 = vperm.slane %v319, 0
    %v323 = vadd.f32 %v321, %v322
    %324 = vrot.lane.b32.xlu0 %v95, 32
    %v325 = vpop.permute.xlu0 %324
    %v327 = vadd.f32 %v323, %v325
    %vm328 = vcmp.ge.f32.partialorder %v327, 0.0
    %v329 = vmul.f32 %v327, 0.01
    %v330 = vsel %vm328, %v327, %v329
    %v332 = vsel %vm116, %v330, 0
    %334 = vmatpush.msra.mxu0 0.0
    %335 = vmatpush.msra.mxu0 0.0
    %336 = vmatpush.msra.mxu0 0.0
    %337 = vmatpush.msra.mxu0 0.0
    %338 = vmatpush.msra.mxu0 0.0
    %339 = vmatpush.msra.mxu0 0.0
    %340 = vmatpush.msra.mxu0 0.0
    %341 = vmatpush.msra.mxu0 0.0
    %342 = vmatpush.msra.mxu0 0.0
    %343 = vmatpush.msra.mxu0 0.0
    %344 = vmatpush.msra.mxu0 0.0
    %345 = vmatpush.msra.mxu0 0.0
    %346 = vmatpush.msra.mxu0 %v258
    %347 = vmatpush.msra.mxu0 %v257
    %348 = vmatpush.msra.mxu0 %v256
    %349 = vmatpush.msra.mxu0 %v255
    %350 = vmatmul.f32.gmra.mxu0 %v332
    %v351 = vpop.f32.mrf.mxu0
    %v352 = vadd.f32 0.0, %v351
    %353 = vdwg.mxu0
    %v354 = vsel %vm140, %v352, 0.0
    %v355 = vrot.slane %v354, 4
    %v356 = vadd.f32 %v354, %v355
    %v357 = vrot.slane %v356, 2
    %v358 = vadd.f32 %v356, %v357
    %v359 = vrot.slane %v358, 1
    %v360 = vadd.f32 %v358, %v359
    %v361 = vmul.f32 %v352, %v352
    %v362 = vsel %vm140, %v361, 0.0
    %v363 = vrot.slane %v362, 4
    %v364 = vadd.f32 %v362, %v363
    %v365 = vrot.slane %v364, 2
    %v366 = vadd.f32 %v364, %v365
    %v367 = vrot.slane %v366, 1
    %v368 = vadd.f32 %v366, %v367
    %v369 = vmul.f32 %v360, 0.25
    %v370 = vmul.f32 %v368, 0.25
    %v371 = vmul.f32 %v369, %v369
    %v372 = vsub.f32 %v370, %v371
    %v373 = vmax.f32 %v372, 0.0
    %v374 = vadd.f32 %v373, 1e-05
    %v375 = vrsqrt.pop %v374
    %v376 = vmul.f32 %v375, %v374
    %v377 = vmul.f32 %v376, %v375
    %v378 = vmul.f32 0.5, %v377
    %v379 = vsub.f32 1.5, %v378
    %v380 = vmul.f32 %v375, %v379
    %vm381 = vweird.f32 %v374
    %vm382 = vweird.f32 %v375
    %vm383 = vmor %vm381, %vm382
    %v384 = vsel %vm383, %v375, %v380
    %v385 = vmul.f32 %v261, %v384
    %v386 = vmul.f32 %v369, %v385
    %v387 = vsub.f32 %v262, %v386
    %v388 = vperm.slane %v385, 0
    %v389 = vmul.f32 %v352, %v388
    %v390 = vperm.slane %v387, 0
    %v391 = vadd.f32 %v389, %v390
    %v392 = vadd.f32 %v391, %v250
    %vm393 = vcmp.ge.f32.partialorder %v392, 0.0
    %v394 = vmul.f32 %v392, 0.01
    %v395 = vsel %vm393, %v392, %v394
    %v396 = vld [vmem:[#allocation2 + $0xb0] sm:$0xff]
    %v397 = vld [vmem:[#allocation2 + $0xb8] sm:$0xff]
    %v398 = vld [vmem:[#allocation2 + $0xc0] sm:$0xff]
    %v399 = vld [vmem:[#allocation2 + $0xc8] sm:$0xff]
    %v400 = vld [vmem:[#allocation2 + $0x28] sm:$0x1]
    %v401 = vperm.slane %v400, 0
    %v403 = vsel %vm116, %v395, 0
    %405 = vmatpush.msra.mxu0 0.0
    %406 = vmatpush.msra.mxu0 0.0
    %407 = vmatpush.msra.mxu0 0.0
    %408 = vmatpush.msra.mxu0 0.0
    %409 = vmatpush.msra.mxu0 0.0
    %410 = vmatpush.msra.mxu0 0.0
    %411 = vmatpush.msra.mxu0 0.0
    %412 = vmatpush.msra.mxu0 0.0
    %413 = vmatpush.msra.mxu0 0.0
    %414 = vmatpush.msra.mxu0 0.0
    %415 = vmatpush.msra.mxu0 0.0
    %416 = vmatpush.msra.mxu0 0.0
    %417 = vmatpush.msra.mxu0 %v399
    %418 = vmatpush.msra.mxu0 %v398
    %419 = vmatpush.msra.mxu0 %v397
    %420 = vmatpush.msra.mxu0 %v396
    %421 = vmatmul.f32.gmra.mxu0 %v403
    %v422 = vpop.f32.mrf.mxu0
    %v423 = vadd.f32 %v401, %v422
    %424 = vdwg.mxu0
    %vm425 = vcmask 125952
    %426 = vst.msk [vmem:[#allocation5] sm:$0xf] %vm425, %v423
    // Predicated region
    $region14: #{patch_made_forward.1} parent=1 // pred_check
      _
    $region15: #{patch_made_forward.1} parent=1 // pred_check_branch
      %428 = sbr.rel (0) target = $region17
    $region16: #{patch_made_forward.1} parent=1 // pred_region
      %430 = vsyncadd [#allocation4], 0
      %s432 = sshll.u32 [#allocation5], 4
      %s433 = int_to_ptr.vmem [resolvable:$true] %s432
      %s434 = sshll.u32 %s2, 4
      %s435 = int_to_ptr.hbm [resolvable:$true] %s434
      %437 = dma.vmem_to_hbm [thread:$0]  %s433, 64, %s435, [#allocation4]
    $region17: #{patch_made_forward.1} parent=1 // pred_fallthru
      _
    // Predicated region
    $region18: #{patch_made_forward.1} parent=1 // pred_check
      _
    $region19: #{patch_made_forward.1} parent=1 // pred_check_branch
      %439 = sbr.rel (0) target = $region21
    $region20: #{patch_made_forward.1} parent=1 // pred_region
      %441 = dma.done [#allocation4], 64
    $region21: #{patch_made_forward.1} parent=1 // pred_fallthru
      _
    %442 = vsyncpa [#allocation3], 1
    %443 = vsyncpa [#allocation4], 1

</llo_original>
